<compile_context>
chip_gen: v7x
topology: tpu7x:2x2x1
jax: 0.10.0
libtpu: 0.0.40
codegen_flags: <defaults>
</compile_context>

<pallas_src>
import jax
import jax.numpy as jnp
from jax.experimental import pallas as pl
from jax.experimental.pallas import tpu as pltpu  # noqa: F401

ALPHA = 1.0
LANE = 128


def _round_up(n, m):
    return ((n + m - 1) // m) * m


def dec_kernel(x_ref, w1_ref, b1_ref, w2_ref, b2_ref, c_ref, csq_ref, out_ref):
    dp = w2_ref.shape[1]  # static: columns [0, dp) of out hold z, [dp, ...) hold q

    # ---- encoder: z = relu(x @ W1 + b1) @ W2 + b2  (H and D zero-padded) ----
    x = x_ref[...]
    h = jnp.dot(x, w1_ref[...], preferred_element_type=jnp.float32) + b1_ref[...]
    h = jnp.maximum(h, 0.0)
    z = jnp.dot(h, w2_ref[...], preferred_element_type=jnp.float32) + b2_ref[...]
    out_ref[:, :dp] = z.astype(out_ref.dtype)  # lane-aligned 128-wide store

    # ---- clustering layer (Student's t-distribution kernel) ----
    # c_ref  = -2 * clusters^T, zero-padded to (Dp, Kp)   -> cross = -2 z.c
    # csq_ref = ||c_k||^2 (precomputed), 1e30 in padded columns -> self-masking
    #   distances[b, k] = ||z_b||^2 - 2 z_b . c_k + ||c_k||^2
    z_sq = jnp.sum(z * z, axis=-1, keepdims=True)                       # (B, 1)
    cross = jnp.dot(z, c_ref[...], preferred_element_type=jnp.float32)  # (B, Kp)
    distances = jnp.maximum(z_sq + cross + csq_ref[...], 0.0)

    if ALPHA != 1.0:  # static: elided for the default alpha=1
        distances = distances / ALPHA
    q = pl.reciprocal(1.0 + distances, approx=True)
    if (ALPHA + 1.0) / 2.0 != 1.0:  # static: pow is exp(log()) on EUP, skip when identity
        q = q ** ((ALPHA + 1.0) / 2.0)

    # Exact f32 divide for the normalization (single (8,128) op; keeps row sums
    # of q at f32 precision in case q feeds DEC's target distribution / KL loss).
    q = q / jnp.sum(q, axis=1, keepdims=True)
    out_ref[:, dp:] = q.astype(out_ref.dtype)  # lane-aligned 128-wide store


def prepare_dec_params(w1, b1, w2, b2, clusters):
    """One-time parameter prep (pad / transpose / fold constants). Cache the result."""
    F, H = w1.shape
    D = w2.shape[1]
    K = clusters.shape[0]

    Hp = _round_up(H, LANE)
    Dp = _round_up(D, LANE)
    Kp = _round_up(K, LANE)

    w1_p = jnp.zeros((F, Hp), jnp.float32).at[:, :H].set(w1)
    b1_p = jnp.zeros((1, Hp), jnp.float32).at[:, :H].set(b1.reshape(1, H))
    w2_p = jnp.zeros((Hp, Dp), jnp.float32).at[:H, :D].set(w2)
    b2_p = jnp.zeros((1, Dp), jnp.float32).at[:, :D].set(b2.reshape(1, D))
    # Fold -2 into the pre-transposed, zero-padded clusters (no XLU transpose
    # and no extra VPU multiply in the kernel).
    c_p = jnp.zeros((Dp, Kp), jnp.float32).at[:D, :K].set(-2.0 * clusters.T)
    # Precomputed ||c_k||^2; 1e30 in padded columns so q there is ~0 and the
    # kernel needs no iota/where mask before the row normalization.
    c_sq = jnp.full((1, Kp), 1e30, jnp.float32).at[:, :K].set(
        jnp.sum(clusters * clusters, axis=1)[None, :])

    params = dict(w1=w1_p, b1=b1_p, w2=w2_p, b2=b2_p, c=c_p, c_sq=c_sq)
    dims = (D, K, Dp, Kp)
    return params, dims


def dec_forward(x, params, dims):
    B = x.shape[0]
    D, K, Dp, Kp = dims

    full = lambda shape: pl.BlockSpec(shape, lambda: (0,) * len(shape))

    out = pl.pallas_call(
        dec_kernel,
        out_shape=jax.ShapeDtypeStruct((B, Dp + Kp), jnp.float32),
        grid=(),
        in_specs=[
            full(x.shape),
            full(params["w1"].shape),
            full(params["b1"].shape),
            full(params["w2"].shape),
            full(params["b2"].shape),
            full(params["c"].shape),
            full(params["c_sq"].shape),
        ],
        out_specs=full((B, Dp + Kp)),
    )(x, params["w1"], params["b1"], params["w2"], params["b2"],
      params["c"], params["c_sq"])

    # Padded z columns are exact zeros; padded q columns are ~0 (self-masked).
    z = out[:, :D]
    q = out[:, Dp:Dp + K]
    return z, q


def xavier_uniform(key, shape):
    fan_in, fan_out = shape[0], shape[1]
    limit = (6.0 / (fan_in + fan_out)) ** 0.5
    return jax.random.uniform(key, shape, jnp.float32, -limit, limit)


if __name__ == "__main__":
    # Small shapes consistent with the module's forward:
    #   encoder: F=64 -> H=32 -> D=16 (embeddings_dim), K=10 clusters.
    B, F, H, D, K = 8, 64, 32, 16, 10

    key = jax.random.PRNGKey(0)
    kx, k1, k2, kc = jax.random.split(key, 4)

    x = jax.random.normal(kx, (B, F), jnp.float32)

    # Deterministic parameter init (synthetic; no checkpoint load).
    w1 = xavier_uniform(k1, (F, H))
    b1 = jnp.zeros((1, H), jnp.float32)
    w2 = xavier_uniform(k2, (H, D))
    b2 = jnp.zeros((1, D), jnp.float32)
    clusters = xavier_uniform(kc, (K, D))  # nn.init.xavier_uniform_ on (K, D)

    # One-time parameter prep (hoisted out of the per-call path).
    params, dims = prepare_dec_params(w1, b1, w2, b2, clusters)
    jax.block_until_ready(params)

    z, q = dec_forward(x, params, dims)
    jax.block_until_ready((z, q))

    # Pure-JAX reference check (same math as the PyTorch module).
    h_ref = jnp.maximum(x @ w1 + b1, 0.0)
    z_ref = h_ref @ w2 + b2
    dist_ref = jnp.sum((z_ref[:, None, :] - clusters[None, :, :]) ** 2, axis=2)
    q_ref = 1.0 / (1.0 + dist_ref / ALPHA)
    q_ref = q_ref ** ((ALPHA + 1.0) / 2.0)
    q_ref = q_ref / jnp.sum(q_ref, axis=1, keepdims=True)

    assert jnp.allclose(z, z_ref, atol=1e-4, rtol=1e-4)
    # q uses the approx EUP reciprocal for 1/(1+d) (row normalization is now an
    # exact divide), so its tolerance is slightly looser than z's.
    assert jnp.allclose(q, q_ref, atol=2e-3, rtol=2e-3)

    print("KERNEL_OK")
</pallas_src>

<mosaic_0001>
module attributes {stable_mosaic.version = 11 : i64} {
  func.func @dec_kernel(%arg0: memref<8x64xf32, #tpu.memory_space<vmem>>, %arg1: memref<64x128xf32, #tpu.memory_space<vmem>>, %arg2: memref<1x128xf32, #tpu.memory_space<vmem>>, %arg3: memref<128x128xf32, #tpu.memory_space<vmem>>, %arg4: memref<1x128xf32, #tpu.memory_space<vmem>>, %arg5: memref<128x128xf32, #tpu.memory_space<vmem>>, %arg6: memref<1x128xf32, #tpu.memory_space<vmem>>, %arg7: memref<8x256xf32, #tpu.memory_space<vmem>>) attributes {dimension_semantics = [], scalar_prefetch = 0 : i64, scratch_operands = 0 : i64, tpu.core_type = #tpu.core_type<tc>} {
    %c0 = arith.constant 0 : index
    %c0_0 = arith.constant 0 : index
    %0 = vector.load %arg0[%c0, %c0_0] : memref<8x64xf32, #tpu.memory_space<vmem>>, vector<8x64xf32>
    %c0_1 = arith.constant 0 : index
    %c0_2 = arith.constant 0 : index
    %1 = vector.load %arg1[%c0_1, %c0_2] : memref<64x128xf32, #tpu.memory_space<vmem>>, vector<64x128xf32>
    %cst = arith.constant dense<0.000000e+00> : vector<8x128xf32>
    %2 = tpu.matmul %0, %1, %cst {dimension_numbers = #tpu.dot_dimension_numbers<[1], [0], [0], [1], [0, 0, 1, 1], [], []>} : vector<8x64xf32>, vector<64x128xf32>, vector<8x128xf32> -> vector<8x128xf32>
    %c0_3 = arith.constant 0 : index
    %c0_4 = arith.constant 0 : index
    %3 = vector.load %arg2[%c0_3, %c0_4] : memref<1x128xf32, #tpu.memory_space<vmem>>, vector<1x128xf32>
    %4 = vector.broadcast %3 : vector<1x128xf32> to vector<8x128xf32>
    %5 = arith.addf %2, %4 : vector<8x128xf32>
    %cst_5 = arith.constant 0.000000e+00 : f32
    %6 = vector.broadcast %cst_5 : f32 to vector<8x128xf32>
    %7 = arith.maximumf %5, %6 : vector<8x128xf32>
    %c0_6 = arith.constant 0 : index
    %c0_7 = arith.constant 0 : index
    %8 = vector.load %arg3[%c0_6, %c0_7] : memref<128x128xf32, #tpu.memory_space<vmem>>, vector<128x128xf32>
    %cst_8 = arith.constant dense<0.000000e+00> : vector<8x128xf32>
    %9 = tpu.matmul %7, %8, %cst_8 {dimension_numbers = #tpu.dot_dimension_numbers<[1], [0], [0], [1], [0, 0, 1, 1], [], []>} : vector<8x128xf32>, vector<128x128xf32>, vector<8x128xf32> -> vector<8x128xf32>
    %c0_9 = arith.constant 0 : index
    %c0_10 = arith.constant 0 : index
    %10 = vector.load %arg4[%c0_9, %c0_10] : memref<1x128xf32, #tpu.memory_space<vmem>>, vector<1x128xf32>
    %11 = vector.broadcast %10 : vector<1x128xf32> to vector<8x128xf32>
    %12 = arith.addf %9, %11 : vector<8x128xf32>
    %c0_11 = arith.constant 0 : index
    %c0_12 = arith.constant 0 : index
    %13 = vector.load %arg7[%c0_11, %c0_12] : memref<8x256xf32, #tpu.memory_space<vmem>>, vector<8x128xf32>
    tpu.vector_store %arg7[%c0_11, %c0_12], %12 {strides = array<i32>} : memref<8x256xf32, #tpu.memory_space<vmem>>, vector<8x128xf32>,
    %14 = arith.mulf %12, %12 : vector<8x128xf32>
    %cst_13 = arith.constant dense<0.000000e+00> : vector<8xf32>
    %15 = vector.multi_reduction <add>, %14, %cst_13 [1] : vector<8x128xf32> to vector<8xf32>
    %16 = vector.shape_cast %15 : vector<8xf32> to vector<8x1xf32>
    %c0_14 = arith.constant 0 : index
    %c0_15 = arith.constant 0 : index
    %17 = vector.load %arg5[%c0_14, %c0_15] : memref<128x128xf32, #tpu.memory_space<vmem>>, vector<128x128xf32>
    %cst_16 = arith.constant dense<0.000000e+00> : vector<8x128xf32>
    %18 = tpu.matmul %12, %17, %cst_16 {dimension_numbers = #tpu.dot_dimension_numbers<[1], [0], [0], [1], [0, 0, 1, 1], [], []>} : vector<8x128xf32>, vector<128x128xf32>, vector<8x128xf32> -> vector<8x128xf32>
    %19 = vector.broadcast %16 : vector<8x1xf32> to vector<8x128xf32>
    %20 = arith.addf %19, %18 : vector<8x128xf32>
    %c0_17 = arith.constant 0 : index
    %c0_18 = arith.constant 0 : index
    %21 = vector.load %arg6[%c0_17, %c0_18] : memref<1x128xf32, #tpu.memory_space<vmem>>, vector<1x128xf32>
    %22 = vector.broadcast %21 : vector<1x128xf32> to vector<8x128xf32>
    %23 = arith.addf %20, %22 : vector<8x128xf32>
    %cst_19 = arith.constant 0.000000e+00 : f32
    %24 = vector.broadcast %cst_19 : f32 to vector<8x128xf32>
    %25 = arith.maximumf %23, %24 : vector<8x128xf32>
    %cst_20 = arith.constant 1.000000e+00 : f32
    %26 = vector.broadcast %cst_20 : f32 to vector<8x128xf32>
    %27 = arith.addf %26, %25 : vector<8x128xf32>
    %28 = tpu.reciprocal %27 {approx = true} : vector<8x128xf32> -> vector<8x128xf32>
    %cst_21 = arith.constant dense<0.000000e+00> : vector<8xf32>
    %29 = vector.multi_reduction <add>, %28, %cst_21 [1] : vector<8x128xf32> to vector<8xf32>
    %30 = vector.shape_cast %29 : vector<8xf32> to vector<8x1xf32>
    %31 = vector.broadcast %30 : vector<8x1xf32> to vector<8x128xf32>
    %32 = arith.divf %28, %31 : vector<8x128xf32>
    %c0_22 = arith.constant 0 : index
    %c128 = arith.constant 128 : index
    %33 = vector.load %arg7[%c0_22, %c128] : memref<8x256xf32, #tpu.memory_space<vmem>>, vector<8x128xf32>
    tpu.vector_store %arg7[%c0_22, %c128], %32 {strides = array<i32>} : memref<8x256xf32, #tpu.memory_space<vmem>>, vector<8x128xf32>,
    return
  }
}

</mosaic_0001>

<llo_original>
// kernel: tpu_custom_call.1
$region0: #{tpu_custom_call.1}
  #allocation0 [shape = 'u32[]', space=smem, size = 0x4, offset = 0x4, fixed_abs, tag = 'smem constant byte address 0x4 - core index']
  #allocation1 [shape = 'u32[144,128]{1,0:T(1,128)}', space=vmem, size = 0x12000, scoped, tag = 'internal scratch']
  %s0 = inlined_call_operand.hbm [shape: f32[8,64], index: 0, kind: input, shape index: {}]
  %s1 = inlined_call_operand.hbm [shape: f32[64,128], index: 1, kind: input, shape index: {}]
  %s2 = inlined_call_operand.vmem [shape: f32[1,128], index: 2, kind: input, shape index: {}]
  %s3 = inlined_call_operand.hbm [shape: f32[128,128], index: 3, kind: input, shape index: {}]
  %s4 = inlined_call_operand.vmem [shape: f32[1,128], index: 4, kind: input, shape index: {}]
  %s5 = inlined_call_operand.hbm [shape: f32[128,128], index: 5, kind: input, shape index: {}]
  %s6 = inlined_call_operand.vmem [shape: f32[1,128], index: 6, kind: input, shape index: {}]
  %s7 = inlined_call_operand.hbm [shape: f32[8,256], index: 7, kind: output, shape index: {}]
  %s8 = sld [smem:[#allocation0]]
  $region54: #{tpu_custom_call.1} parent=0
    _
  %s10 = ssub.s32 1, %s8
  %s11 = scalar_select 0, %s10, %s8
  $region1: #{tpu_custom_call.1} parent=0
    #allocation2 [shape = 'u8[4096]{0}', space=vmem, size = 0x1000, scoped, tag = 'input window, operand 0, single buffered']
    #allocation3 [shape = 's32[1]{0}', space=sflag, size = 0x4, scoped, tag = 'scoped memory for tpu_custom_call.1']
    #allocation4 [shape = 's32[1]{0}', space=sflag, size = 0x4, scoped, tag = 'scoped memory for tpu_custom_call.1']
    #allocation5 [shape = 'u8[32768]{0}', space=vmem, size = 0x8000, scoped, tag = 'input window, operand 1, single buffered']
    #allocation6 [shape = 's32[1]{0}', space=sflag, size = 0x4, scoped, tag = 'scoped memory for tpu_custom_call.1']
    #allocation7 [shape = 'u8[65536]{0}', space=vmem, size = 0x10000, scoped, tag = 'input window, operand 3, single buffered']
    #allocation8 [shape = 'u8[65536]{0}', space=vmem, size = 0x10000, scoped, tag = 'input window, operand 5, single buffered']
    #allocation9 [shape = 's32[1]{0}', space=sflag, size = 0x4, scoped, tag = 'scoped memory for tpu_custom_call.1']
    #allocation10 [shape = 'u8[8192]{0}', space=vmem, size = 0x2000, scoped, tag = 'output window, operand 0, single buffered']
    %12 = vsyncpa [#allocation3], 0
    %13 = vsyncpa [#allocation6], 0
    %14 = vsyncpa [#allocation9], 0
    %15 = vsyncpa [#allocation4], 0
    // Predicated region
    $region2: #{tpu_custom_call.1} parent=1 // pred_check
      _
    $region3: #{tpu_custom_call.1} parent=1 // pred_check_branch
      %17 = sbr.rel (0) target = $region5
    $region4: #{tpu_custom_call.1} parent=1 // pred_region
      %s19 = ssub.s32 128, 128
      %20 = vsyncadd [#allocation3], %s19
      %s22 = sshll.u32 [#allocation2], 4
      %s23 = int_to_ptr.vmem [resolvable:$true] %s22
      %25 = dma.hbm_to_vmem [thread:$0]  %s0, 128, %s23, [#allocation3]
    $region5: #{tpu_custom_call.1} parent=1 // pred_fallthru
      _
    // Predicated region
    $region6: #{tpu_custom_call.1} parent=1 // pred_check
      _
    $region7: #{tpu_custom_call.1} parent=1 // pred_check_branch
      %27 = sbr.rel (0) target = $region9
    $region8: #{tpu_custom_call.1} parent=1 // pred_region
      %s29 = ssub.s32 1024, 1024
      %30 = vsyncadd [#allocation6], %s29
      %s31 = sshll.u32 [#allocation5], 4
      %s32 = int_to_ptr.vmem [resolvable:$true] %s31
      %37 = dma.hbm_to_vmem [thread:$0]  %s1, 1024, %s32, [#allocation6], 128, 128, 8
    $region9: #{tpu_custom_call.1} parent=1 // pred_fallthru
      _
    // Predicated region
    $region10: #{tpu_custom_call.1} parent=1 // pred_check
      _
    $region11: #{tpu_custom_call.1} parent=1 // pred_check_branch
      %39 = sbr.rel (0) target = $region13
    $region12: #{tpu_custom_call.1} parent=1 // pred_region
      _
    $region13: #{tpu_custom_call.1} parent=1 // pred_fallthru
      _
    // Predicated region
    $region14: #{tpu_custom_call.1} parent=1 // pred_check
      _
    $region15: #{tpu_custom_call.1} parent=1 // pred_check_branch
      %41 = sbr.rel (0) target = $region17
    $region16: #{tpu_custom_call.1} parent=1 // pred_region
      %s43 = ssub.s32 2048, 2048
      %44 = vsyncadd [#allocation6], %s43
      %s45 = sshll.u32 [#allocation7], 4
      %s46 = int_to_ptr.vmem [resolvable:$true] %s45
      %51 = dma.hbm_to_vmem [thread:$0]  %s3, 2048, %s46, [#allocation6], 128, 128, 8
    $region17: #{tpu_custom_call.1} parent=1 // pred_fallthru
      _
    // Predicated region
    $region18: #{tpu_custom_call.1} parent=1 // pred_check
      _
    $region19: #{tpu_custom_call.1} parent=1 // pred_check_branch
      %53 = sbr.rel (0) target = $region21
    $region20: #{tpu_custom_call.1} parent=1 // pred_region
      _
    $region21: #{tpu_custom_call.1} parent=1 // pred_fallthru
      _
    // Predicated region
    $region22: #{tpu_custom_call.1} parent=1 // pred_check
      _
    $region23: #{tpu_custom_call.1} parent=1 // pred_check_branch
      %55 = sbr.rel (0) target = $region25
    $region24: #{tpu_custom_call.1} parent=1 // pred_region
      %s57 = ssub.s32 2048, 2048
      %58 = vsyncadd [#allocation9], %s57
      %s59 = sshll.u32 [#allocation8], 4
      %s60 = int_to_ptr.vmem [resolvable:$true] %s59
      %65 = dma.hbm_to_vmem [thread:$0]  %s5, 2048, %s60, [#allocation9], 128, 128, 8
    $region25: #{tpu_custom_call.1} parent=1 // pred_fallthru
      _
    // Predicated region
    $region26: #{tpu_custom_call.1} parent=1 // pred_check
      _
    $region27: #{tpu_custom_call.1} parent=1 // pred_check_branch
      %67 = sbr.rel (0) target = $region29
    $region28: #{tpu_custom_call.1} parent=1 // pred_region
      _
    $region29: #{tpu_custom_call.1} parent=1 // pred_fallthru
      _
    // Predicated region
    $region30: #{tpu_custom_call.1} parent=1 // pred_check
      _
    $region31: #{tpu_custom_call.1} parent=1 // pred_check_branch
      %69 = sbr.rel (0) target = $region33
    $region32: #{tpu_custom_call.1} parent=1 // pred_region
      %70 = dma.done [#allocation3], 128
    $region33: #{tpu_custom_call.1} parent=1 // pred_fallthru
      _
    // Predicated region
    $region34: #{tpu_custom_call.1} parent=1 // pred_check
      _
    $region35: #{tpu_custom_call.1} parent=1 // pred_check_branch
      %72 = sbr.rel (0) target = $region37
    $region36: #{tpu_custom_call.1} parent=1 // pred_region
      %73 = dma.done [#allocation6], 1024
    $region37: #{tpu_custom_call.1} parent=1 // pred_fallthru
      _
    // Predicated region
    $region38: #{tpu_custom_call.1} parent=1 // pred_check
      _
    $region39: #{tpu_custom_call.1} parent=1 // pred_check_branch
      %75 = sbr.rel (0) target = $region41
    $region40: #{tpu_custom_call.1} parent=1 // pred_region
      %76 = dma.done [#allocation6], 2048
    $region41: #{tpu_custom_call.1} parent=1 // pred_fallthru
      _
    // Predicated region
    $region42: #{tpu_custom_call.1} parent=1 // pred_check
      _
    $region43: #{tpu_custom_call.1} parent=1 // pred_check_branch
      %78 = sbr.rel (0) target = $region45
    $region44: #{tpu_custom_call.1} parent=1 // pred_region
      %79 = dma.done [#allocation9], 2048
    $region45: #{tpu_custom_call.1} parent=1 // pred_fallthru
      _
    %v80 = vld [vmem:[#allocation2] sm:$0xff]
    %v81 = vld [vmem:[#allocation5] sm:$0xff]
    %v82 = vld [vmem:[#allocation5 + $0x8] sm:$0xff]
    %v83 = vld [vmem:[#allocation5 + $0x10] sm:$0xff]
    %v84 = vld [vmem:[#allocation5 + $0x18] sm:$0xff]
    %v85 = vld [vmem:[#allocation5 + $0x20] sm:$0xff]
    %v86 = vld [vmem:[#allocation5 + $0x28] sm:$0xff]
    %v87 = vld [vmem:[#allocation5 + $0x30] sm:$0xff]
    %v88 = vld [vmem:[#allocation5 + $0x38] sm:$0xff]
    %v89 = vld [vmem:[%s2] sm:$0x1]
    %v91 = vlaneseq
    %v92 = vshrl.u32 %v91, 7
    %v93 = vsub.s32 0, %v92
    %v94 = vrot.slane %v89, %v93
    %vm96 = vcmask 523264
    %v98 = vsel %vm96, %v80, 0
    %100 = vmatprep.subr.mxu0 0.0
    %101 = vmatpush1.msra.mxu0 %v81
    %102 = vmatprep.subr.mxu0 0.0
    %103 = vmatpush1.msra.mxu0 %v82
    %104 = vmatprep.subr.mxu0 0.0
    %105 = vmatpush1.msra.mxu0 %v83
    %106 = vmatprep.subr.mxu0 0.0
    %107 = vmatpush1.msra.mxu0 %v84
    %108 = vmatprep.subr.mxu0 0.0
    %109 = vmatpush1.msra.mxu0 %v85
    %110 = vmatprep.subr.mxu0 0.0
    %111 = vmatpush1.msra.mxu0 %v86
    %112 = vmatprep.subr.mxu0 0.0
    %113 = vmatpush1.msra.mxu0 %v87
    %114 = vmatprep.subr.mxu0 0.0
    %115 = vmatpush1.msra.mxu0 %v88
    %116 = vmatprep.subr.mxu0 0.0
    %117 = vmatpush1.msra.mxu0 0.0
    %118 = vmatprep.subr.mxu0 0.0
    %119 = vmatpush1.msra.mxu0 0.0
    %120 = vmatprep.subr.mxu0 0.0
    %121 = vmatpush1.msra.mxu0 0.0
    %122 = vmatprep.subr.mxu0 0.0
    %123 = vmatpush1.msra.mxu0 0.0
    %124 = vmatprep.subr.mxu0 0.0
    %125 = vmatpush1.msra.mxu0 0.0
    %126 = vmatprep.subr.mxu0 0.0
    %127 = vmatpush1.msra.mxu0 0.0
    %128 = vmatprep.subr.mxu0 0.0
    %129 = vmatpush1.msra.mxu0 0.0
    %130 = vmatprep.subr.mxu0 0.0
    %131 = vmatpush1.msra.mxu0 0.0
    %132 = vmatprep.subr.mxu0 0.0
    %133 = vmatpush1.msra.mxu0 0.0
    %134 = vmatprep.subr.mxu0 0.0
    %135 = vmatpush1.msra.mxu0 0.0
    %136 = vmatprep.subr.mxu0 0.0
    %137 = vmatpush1.msra.mxu0 0.0
    %138 = vmatprep.subr.mxu0 0.0
    %139 = vmatpush1.msra.mxu0 0.0
    %140 = vmatprep.subr.mxu0 0.0
    %141 = vmatpush1.msra.mxu0 0.0
    %142 = vmatprep.subr.mxu0 0.0
    %143 = vmatpush1.msra.mxu0 0.0
    %144 = vmatprep.subr.mxu0 0.0
    %145 = vmatpush1.msra.mxu0 0.0
    %146 = vmatprep.subr.mxu0 0.0
    %147 = vmatpush1.msra.mxu0 0.0
    %148 = vmatprep.subr.mxu0 0.0
    %149 = vmatpush1.msra.mxu0 0.0
    %150 = vmatprep.subr.mxu0 0.0
    %151 = vmatpush1.msra.mxu0 0.0
    %152 = vmatprep.subr.mxu0 0.0
    %153 = vmatpush1.msra.mxu0 0.0
    %154 = vmatprep.subr.mxu0 0.0
    %155 = vmatpush1.msra.mxu0 0.0
    %156 = vmatprep.subr.mxu0 0.0
    %157 = vmatpush1.msra.mxu0 0.0
    %158 = vmatprep.subr.mxu0 0.0
    %159 = vmatpush1.msra.mxu0 0.0
    %160 = vmatprep.subr.mxu0 0.0
    %161 = vmatpush1.msra.mxu0 0.0
    %162 = vmatprep.subr.mxu0 0.0
    %163 = vmatpush1.msra.mxu0 0.0
    %164 = vmatprep.mubr.f32.mxu0 0.0
    %165 = vmatmul.mubr.f32.gmra.mrb[0].mxu0 %v98
    %v166 = vpop.f32.mrb[0].mxu0
    %v167 = vadd.f32 %v94, %v166
    %v168 = vpop.f32.mrb[0].mxu0
    %169 = vdwg.mxu0
    %v170 = vmax.f32 %v167, 0.0
    %v171 = vld [vmem:[#allocation7] sm:$0xff]
    %v172 = vld [vmem:[#allocation7 + $0x8] sm:$0xff]
    %v173 = vld [vmem:[#allocation7 + $0x10] sm:$0xff]
    %v174 = vld [vmem:[#allocation7 + $0x18] sm:$0xff]
    %v175 = vld [vmem:[#allocation7 + $0x20] sm:$0xff]
    %v176 = vld [vmem:[#allocation7 + $0x28] sm:$0xff]
    %v177 = vld [vmem:[#allocation7 + $0x30] sm:$0xff]
    %v178 = vld [vmem:[#allocation7 + $0x38] sm:$0xff]
    %v179 = vld [vmem:[#allocation7 + $0x40] sm:$0xff]
    %v180 = vld [vmem:[#allocation7 + $0x48] sm:$0xff]
    %v181 = vld [vmem:[#allocation7 + $0x50] sm:$0xff]
    %v182 = vld [vmem:[#allocation7 + $0x58] sm:$0xff]
    %v183 = vld [vmem:[#allocation7 + $0x60] sm:$0xff]
    %v184 = vld [vmem:[#allocation7 + $0x68] sm:$0xff]
    %v185 = vld [vmem:[#allocation7 + $0x70] sm:$0xff]
    %v186 = vld [vmem:[#allocation7 + $0x78] sm:$0xff]
    %v187 = vld [vmem:[%s4] sm:$0x1]
    %v189 = vlaneseq
    %v190 = vshrl.u32 %v189, 7
    %v191 = vsub.s32 0, %v190
    %v192 = vrot.slane %v187, %v191
    %194 = vmatprep.subr.mxu0 0.0
    %195 = vmatpush1.msra.mxu0 %v171
    %196 = vmatprep.subr.mxu0 0.0
    %197 = vmatpush1.msra.mxu0 %v172
    %198 = vmatprep.subr.mxu0 0.0
    %199 = vmatpush1.msra.mxu0 %v173
    %200 = vmatprep.subr.mxu0 0.0
    %201 = vmatpush1.msra.mxu0 %v174
    %202 = vmatprep.subr.mxu0 0.0
    %203 = vmatpush1.msra.mxu0 %v175
    %204 = vmatprep.subr.mxu0 0.0
    %205 = vmatpush1.msra.mxu0 %v176
    %206 = vmatprep.subr.mxu0 0.0
    %207 = vmatpush1.msra.mxu0 %v177
    %208 = vmatprep.subr.mxu0 0.0
    %209 = vmatpush1.msra.mxu0 %v178
    %210 = vmatprep.subr.mxu0 0.0
    %211 = vmatpush1.msra.mxu0 %v179
    %212 = vmatprep.subr.mxu0 0.0
    %213 = vmatpush1.msra.mxu0 %v180
    %214 = vmatprep.subr.mxu0 0.0
    %215 = vmatpush1.msra.mxu0 %v181
    %216 = vmatprep.subr.mxu0 0.0
    %217 = vmatpush1.msra.mxu0 %v182
    %218 = vmatprep.subr.mxu0 0.0
    %219 = vmatpush1.msra.mxu0 %v183
    %220 = vmatprep.subr.mxu0 0.0
    %221 = vmatpush1.msra.mxu0 %v184
    %222 = vmatprep.subr.mxu0 0.0
    %223 = vmatpush1.msra.mxu0 %v185
    %224 = vmatprep.subr.mxu0 0.0
    %225 = vmatpush1.msra.mxu0 %v186
    %226 = vmatprep.subr.mxu0 0.0
    %227 = vmatpush1.msra.mxu0 0.0
    %228 = vmatprep.subr.mxu0 0.0
    %229 = vmatpush1.msra.mxu0 0.0
    %230 = vmatprep.subr.mxu0 0.0
    %231 = vmatpush1.msra.mxu0 0.0
    %232 = vmatprep.subr.mxu0 0.0
    %233 = vmatpush1.msra.mxu0 0.0
    %234 = vmatprep.subr.mxu0 0.0
    %235 = vmatpush1.msra.mxu0 0.0
    %236 = vmatprep.subr.mxu0 0.0
    %237 = vmatpush1.msra.mxu0 0.0
    %238 = vmatprep.subr.mxu0 0.0
    %239 = vmatpush1.msra.mxu0 0.0
    %240 = vmatprep.subr.mxu0 0.0
    %241 = vmatpush1.msra.mxu0 0.0
    %242 = vmatprep.subr.mxu0 0.0
    %243 = vmatpush1.msra.mxu0 0.0
    %244 = vmatprep.subr.mxu0 0.0
    %245 = vmatpush1.msra.mxu0 0.0
    %246 = vmatprep.subr.mxu0 0.0
    %247 = vmatpush1.msra.mxu0 0.0
    %248 = vmatprep.subr.mxu0 0.0
    %249 = vmatpush1.msra.mxu0 0.0
    %250 = vmatprep.subr.mxu0 0.0
    %251 = vmatpush1.msra.mxu0 0.0
    %252 = vmatprep.subr.mxu0 0.0
    %253 = vmatpush1.msra.mxu0 0.0
    %254 = vmatprep.subr.mxu0 0.0
    %255 = vmatpush1.msra.mxu0 0.0
    %256 = vmatprep.subr.mxu0 0.0
    %257 = vmatpush1.msra.mxu0 0.0
    %258 = vmatprep.mubr.f32.mxu0 0.0
    %259 = vmatmul.mubr.f32.gmra.mrb[0].mxu0 %v170
    %v260 = vpop.f32.mrb[0].mxu0
    %v261 = vadd.f32 %v192, %v260
    %v262 = vpop.f32.mrb[0].mxu0
    %263 = vdwg.mxu0
    %264 = vst [vmem:[#allocation10] sm:$0xff] %v261
    %v265 = vmul.f32 %v261, %v261
    %266 = vadd.xlane.f32.xlu0 %v265
    %v267 = vpop.xlane.xlu0 %266
    %v268 = vld [vmem:[#allocation8] sm:$0xff]
    %v269 = vld [vmem:[#allocation8 + $0x8] sm:$0xff]
    %v270 = vld [vmem:[#allocation8 + $0x10] sm:$0xff]
    %v271 = vld [vmem:[#allocation8 + $0x18] sm:$0xff]
    %v272 = vld [vmem:[#allocation8 + $0x20] sm:$0xff]
    %v273 = vld [vmem:[#allocation8 + $0x28] sm:$0xff]
    %v274 = vld [vmem:[#allocation8 + $0x30] sm:$0xff]
    %v275 = vld [vmem:[#allocation8 + $0x38] sm:$0xff]
    %v276 = vld [vmem:[#allocation8 + $0x40] sm:$0xff]
    %v277 = vld [vmem:[#allocation8 + $0x48] sm:$0xff]
    %v278 = vld [vmem:[#allocation8 + $0x50] sm:$0xff]
    %v279 = vld [vmem:[#allocation8 + $0x58] sm:$0xff]
    %v280 = vld [vmem:[#allocation8 + $0x60] sm:$0xff]
    %v281 = vld [vmem:[#allocation8 + $0x68] sm:$0xff]
    %v282 = vld [vmem:[#allocation8 + $0x70] sm:$0xff]
    %v283 = vld [vmem:[#allocation8 + $0x78] sm:$0xff]
    %284 = vmatprep.subr.mxu0 0.0
    %285 = vmatpush1.msra.mxu0 %v268
    %286 = vmatprep.subr.mxu0 0.0
    %287 = vmatpush1.msra.mxu0 %v269
    %288 = vmatprep.subr.mxu0 0.0
    %289 = vmatpush1.msra.mxu0 %v270
    %290 = vmatprep.subr.mxu0 0.0
    %291 = vmatpush1.msra.mxu0 %v271
    %292 = vmatprep.subr.mxu0 0.0
    %293 = vmatpush1.msra.mxu0 %v272
    %294 = vmatprep.subr.mxu0 0.0
    %295 = vmatpush1.msra.mxu0 %v273
    %296 = vmatprep.subr.mxu0 0.0
    %297 = vmatpush1.msra.mxu0 %v274
    %298 = vmatprep.subr.mxu0 0.0
    %299 = vmatpush1.msra.mxu0 %v275
    %300 = vmatprep.subr.mxu0 0.0
    %301 = vmatpush1.msra.mxu0 %v276
    %302 = vmatprep.subr.mxu0 0.0
    %303 = vmatpush1.msra.mxu0 %v277
    %304 = vmatprep.subr.mxu0 0.0
    %305 = vmatpush1.msra.mxu0 %v278
    %306 = vmatprep.subr.mxu0 0.0
    %307 = vmatpush1.msra.mxu0 %v279
    %308 = vmatprep.subr.mxu0 0.0
    %309 = vmatpush1.msra.mxu0 %v280
    %310 = vmatprep.subr.mxu0 0.0
    %311 = vmatpush1.msra.mxu0 %v281
    %312 = vmatprep.subr.mxu0 0.0
    %313 = vmatpush1.msra.mxu0 %v282
    %314 = vmatprep.subr.mxu0 0.0
    %315 = vmatpush1.msra.mxu0 %v283
    %316 = vmatprep.subr.mxu0 0.0
    %317 = vmatpush1.msra.mxu0 0.0
    %318 = vmatprep.subr.mxu0 0.0
    %319 = vmatpush1.msra.mxu0 0.0
    %320 = vmatprep.subr.mxu0 0.0
    %321 = vmatpush1.msra.mxu0 0.0
    %322 = vmatprep.subr.mxu0 0.0
    %323 = vmatpush1.msra.mxu0 0.0
    %324 = vmatprep.subr.mxu0 0.0
    %325 = vmatpush1.msra.mxu0 0.0
    %326 = vmatprep.subr.mxu0 0.0
    %327 = vmatpush1.msra.mxu0 0.0
    %328 = vmatprep.subr.mxu0 0.0
    %329 = vmatpush1.msra.mxu0 0.0
    %330 = vmatprep.subr.mxu0 0.0
    %331 = vmatpush1.msra.mxu0 0.0
    %332 = vmatprep.subr.mxu0 0.0
    %333 = vmatpush1.msra.mxu0 0.0
    %334 = vmatprep.subr.mxu0 0.0
    %335 = vmatpush1.msra.mxu0 0.0
    %336 = vmatprep.subr.mxu0 0.0
    %337 = vmatpush1.msra.mxu0 0.0
    %338 = vmatprep.subr.mxu0 0.0
    %339 = vmatpush1.msra.mxu0 0.0
    %340 = vmatprep.subr.mxu0 0.0
    %341 = vmatpush1.msra.mxu0 0.0
    %342 = vmatprep.subr.mxu0 0.0
    %343 = vmatpush1.msra.mxu0 0.0
    %344 = vmatprep.subr.mxu0 0.0
    %345 = vmatpush1.msra.mxu0 0.0
    %346 = vmatprep.subr.mxu0 0.0
    %347 = vmatpush1.msra.mxu0 0.0
    %348 = vmatprep.mubr.f32.mxu0 0.0
    %349 = vmatmul.mubr.f32.gmra.mrb[0].mxu0 %v261
    %v350 = vpop.f32.mrb[0].mxu0
    %v351 = vadd.f32 0.0, %v350
    %v352 = vpop.f32.mrb[0].mxu0
    %353 = vdwg.mxu0
    %v354 = vadd.f32 %v267, %v351
    %v355 = vld [vmem:[%s6] sm:$0x1]
    %v357 = vlaneseq
    %v358 = vshrl.u32 %v357, 7
    %v359 = vsub.s32 0, %v358
    %v360 = vrot.slane %v355, %v359
    %v362 = vadd.f32 %v354, %v360
    %v363 = vmax.f32 %v362, 0.0
    %v364 = vadd.f32 %v363, 1.0
    %v365 = vrcp.pop %v364
    %366 = vadd.xlane.f32.xlu0 %v365
    %v367 = vpop.xlane.xlu0 %366
    %v368 = vrcp.pop %v367
    %v369 = vmul.f32 %v365, %v368
    %370 = vst [vmem:[#allocation10 + $0x8] sm:$0xff] %v369
    // Predicated region
    $region46: #{tpu_custom_call.1} parent=1 // pred_check
      _
    $region47: #{tpu_custom_call.1} parent=1 // pred_check_branch
      %372 = sbr.rel (0) target = $region49
    $region48: #{tpu_custom_call.1} parent=1 // pred_region
      %s374 = ssub.s32 256, 256
      %375 = vsyncadd [#allocation4], %s374
      %s377 = sshll.u32 [#allocation10], 4
      %s378 = int_to_ptr.vmem [resolvable:$true] %s377
      %380 = dma.vmem_to_hbm [thread:$0]  %s378, 256, %s7, [#allocation4]
    $region49: #{tpu_custom_call.1} parent=1 // pred_fallthru
      _
    // Predicated region
    $region50: #{tpu_custom_call.1} parent=1 // pred_check
      _
    $region51: #{tpu_custom_call.1} parent=1 // pred_check_branch
      %382 = sbr.rel (0) target = $region53
    $region52: #{tpu_custom_call.1} parent=1 // pred_region
      %383 = dma.done [#allocation4], 256
    $region53: #{tpu_custom_call.1} parent=1 // pred_fallthru
      _
    %384 = vsyncpa [#allocation3], 1
    %385 = vsyncpa [#allocation6], 1
    %386 = vsyncpa [#allocation9], 1
    %387 = vsyncpa [#allocation4], 1

</llo_original>
